<compile_context>
chip_gen: v7x
topology: tpu7x:2x2x1
jax: 0.10.0
libtpu: 0.0.40
codegen_flags: <defaults>
</compile_context>

<pallas_src>
import functools

import jax
import jax.numpy as jnp
from jax import lax
from jax.experimental import pallas as pl
from jax.experimental.pallas import tpu as pltpu

EPS = 1e-5  # nn.InstanceNorm2d default


def _convblock_kernel(x_ref, w_ref, m_ref, o_ref, *, H, W, Wp, Cout):
    # x_ref: (1, Cin, Lin)   bf16  reflect-padded image, spatial flattened row-major with
    #                              padded row stride Wp (= W+2), plus 2 trailing zeros.
    # w_ref: (9, Cout, Cin)  bf16  conv taps, t = dy*3 + dx.
    # m_ref: (1, Lout)       f32   1.0 on real pixels, 0.0 on the 2 junk columns per row.
    # o_ref: (1, Cout, Lout) f32   Lout = H*Wp; junk columns are cropped by the wrapper.
    Lout = H * Wp

    # Conv as 9 shift-and-matmul accumulations on the MXU (lane dim = flattened spatial).
    acc = jnp.zeros((Cout, Lout), jnp.float32)
    for dy in range(3):
        for dx in range(3):
            off = dy * Wp + dx
            xs = x_ref[0, :, pl.ds(off, Lout)]               # (Cin, Lout) shifted view
            acc = acc + jnp.dot(w_ref[dy * 3 + dx], xs,      # (Cout,Cin) x (Cin,Lout)
                                preferred_element_type=jnp.float32)

    # InstanceNorm2d (affine=False): per-channel stats over the H*W valid pixels only.
    m = m_ref[...]                                           # (1, Lout)
    inv_hw = 1.0 / float(H * W)
    mean = jnp.sum(acc * m, axis=1, keepdims=True) * inv_hw  # (Cout, 1)
    cen = acc - mean
    var = jnp.sum((cen * cen) * m, axis=1, keepdims=True) * inv_hw
    y = cen * lax.rsqrt(var + EPS)                           # rsqrt -> EUP (free slot)

    # ReLU
    o_ref[0] = jnp.maximum(y, 0.0)


def conv_block(x, weight, bias=None):
    """ConvBlock forward (down=True path): Conv2d(3x3, s=1, p=1, reflect) -> IN -> ReLU.

    x: (N, Cin, H, W) f32; weight: (Cout, Cin, 3, 3) f32; bias is ignored (see below).
    Returns (N, Cout, H, W) f32.
    """
    # TODO(synk): ConvTranspose2d branch (down=False) and use_act=False are not implemented.
    del bias  # per-channel conv bias is algebraically cancelled by InstanceNorm(affine=False)

    N, Cin, H, W = x.shape
    Cout = weight.shape[0]
    Hp, Wp = H + 2, W + 2
    Lout = H * Wp            # flattened output length (row stride Wp; 2 junk cols per row)
    Lin = Hp * Wp + 2        # flattened padded input (+2 so the last tap stays in-bounds)

    # Reflect pad (padding_mode='reflect'), flatten spatial, cast the big operand to bf16.
    xp = jnp.pad(x, ((0, 0), (0, 0), (1, 1), (1, 1)), mode="reflect")    # (N, Cin, Hp, Wp)
    xf = jnp.pad(xp.reshape(N, Cin, Hp * Wp), ((0, 0), (0, 0), (0, 2)))  # (N, Cin, Lin)
    xf = xf.astype(jnp.bfloat16)

    # (Cout, Cin, 3, 3) -> (9, Cout, Cin) with tap index t = dy*3 + dx.
    w9 = weight.transpose(2, 3, 0, 1).reshape(9, Cout, Cin).astype(jnp.bfloat16)

    # Valid-pixel mask for the instance-norm statistics (junk columns w >= W excluded).
    col = jnp.arange(Lout, dtype=jnp.int32) % Wp
    mask = (col < W).astype(jnp.float32).reshape(1, Lout)

    kernel = functools.partial(_convblock_kernel, H=H, W=W, Wp=Wp, Cout=Cout)

    yflat = pl.pallas_call(
        kernel,
        out_shape=jax.ShapeDtypeStruct((N, Cout, Lout), jnp.float32),
        grid_spec=pltpu.PrefetchScalarGridSpec(
            num_scalar_prefetch=0,
            grid=(N,),
            in_specs=[
                pl.BlockSpec((1, Cin, Lin), lambda n: (n, 0, 0)),
                pl.BlockSpec((9, Cout, Cin), lambda n: (0, 0, 0)),
                pl.BlockSpec((1, Lout), lambda n: (0, 0)),
            ],
            out_specs=pl.BlockSpec((1, Cout, Lout), lambda n: (n, 0, 0)),
        ),
        compiler_params=pltpu.CompilerParams(
            dimension_semantics=("parallel",)),
    )(xf, w9, mask)

    # Un-flatten (row stride Wp) and crop the 2 junk columns; result is already NCHW.
    return yflat.reshape(N, Cout, H, Wp)[:, :, :, :W]


def _reference(x, weight, bias):
    """Pure-JAX f32 reference: reflect-pad conv (+bias) + instance norm + relu."""
    xp = jnp.pad(x, ((0, 0), (0, 0), (1, 1), (1, 1)), mode="reflect")
    y = lax.conv_general_dilated(
        xp, weight, window_strides=(1, 1), padding="VALID",
        dimension_numbers=("NCHW", "OIHW", "NCHW"))
    y = y + bias.reshape(1, -1, 1, 1)
    mean = jnp.mean(y, axis=(2, 3), keepdims=True)
    var = jnp.mean((y - mean) ** 2, axis=(2, 3), keepdims=True)
    y = (y - mean) * lax.rsqrt(var + EPS)
    return jnp.maximum(y, 0.0)


if __name__ == "__main__":
    key = jax.random.PRNGKey(0)
    kx, kw, kb = jax.random.split(key, 3)

    N, Cin, Cout, H, W = 2, 4, 8, 16, 16
    x = jax.random.normal(kx, (N, Cin, H, W), dtype=jnp.float32)
    # deterministic synthetic parameters (Conv2d(in=4, out=8, kernel_size=3, padding=1))
    weight = jax.random.normal(kw, (Cout, Cin, 3, 3), dtype=jnp.float32) * 0.1
    bias = jax.random.normal(kb, (Cout,), dtype=jnp.float32) * 0.1

    out = conv_block(x, weight, bias)
    jax.block_until_ready(out)

    ref = _reference(x, weight, bias)
    assert out.shape == (N, Cout, H, W)
    # bf16 matmul operands with f32 accumulation/epilogue -> loosened tolerance vs f32 reference.
    assert jnp.max(jnp.abs(out - ref)) < 7e-2
    print("KERNEL_OK")
</pallas_src>

<mosaic_0001>
module attributes {stable_mosaic.version = 11 : i64} {
  func.func @_convblock_kernel(%arg0: i32, %arg1: memref<1x4x326xbf16, #tpu.memory_space<vmem>>, %arg2: memref<9x8x4xbf16, #tpu.memory_space<vmem>>, %arg3: memref<1x288xf32, #tpu.memory_space<vmem>>, %arg4: memref<1x8x288xf32, #tpu.memory_space<vmem>>) attributes {dimension_semantics = [#tpu.dimension_semantics<parallel>], iteration_bounds = array<i64: 2>, scalar_prefetch = 0 : i64, scratch_operands = 0 : i64, tpu.core_type = #tpu.core_type<tc>, window_params = [{transform_indices = @transform_0, window_bounds = array<i64: 1, 4, 326>}, {pipeline_mode = #tpu.pipeline_mode<synchronous>, transform_indices = @transform_1, window_bounds = array<i64: 9, 8, 4>}, {pipeline_mode = #tpu.pipeline_mode<synchronous>, transform_indices = @transform_2, window_bounds = array<i64: 1, 288>}, {transform_indices = @transform_3, window_bounds = array<i64: 1, 8, 288>}]} {
    %cst = arith.constant 0.000000e+00 : f32
    %0 = vector.broadcast %cst : f32 to vector<8x288xf32>
    %c0 = arith.constant 0 : index
    %c0_0 = arith.constant 0 : index
    %c0_1 = arith.constant 0 : index
    %1 = vector.load %arg1[%c0, %c0_0, %c0_1] : memref<1x4x326xbf16, #tpu.memory_space<vmem>>, vector<1x4x288xbf16>
    %2 = vector.shape_cast %1 : vector<1x4x288xbf16> to vector<4x288xbf16>
    %c0_2 = arith.constant 0 : index
    %c0_3 = arith.constant 0 : index
    %c0_4 = arith.constant 0 : index
    %3 = vector.load %arg2[%c0_2, %c0_3, %c0_4] : memref<9x8x4xbf16, #tpu.memory_space<vmem>>, vector<1x8x4xbf16>
    %4 = vector.shape_cast %3 : vector<1x8x4xbf16> to vector<8x4xbf16>
    %cst_5 = arith.constant dense<0.000000e+00> : vector<8x288xf32>
    %5 = tpu.matmul %4, %2, %cst_5 {dimension_numbers = #tpu.dot_dimension_numbers<[1], [0], [0], [1], [0, 0, 1, 1], [], []>} : vector<8x4xbf16>, vector<4x288xbf16>, vector<8x288xf32> -> vector<8x288xf32>
    %6 = arith.addf %0, %5 : vector<8x288xf32>
    %c0_6 = arith.constant 0 : index
    %c0_7 = arith.constant 0 : index
    %c1 = arith.constant 1 : index
    %7 = vector.load %arg1[%c0_6, %c0_7, %c1] : memref<1x4x326xbf16, #tpu.memory_space<vmem>>, vector<1x4x288xbf16>
    %8 = vector.shape_cast %7 : vector<1x4x288xbf16> to vector<4x288xbf16>
    %c1_8 = arith.constant 1 : index
    %c0_9 = arith.constant 0 : index
    %c0_10 = arith.constant 0 : index
    %9 = vector.load %arg2[%c1_8, %c0_9, %c0_10] : memref<9x8x4xbf16, #tpu.memory_space<vmem>>, vector<1x8x4xbf16>
    %10 = vector.shape_cast %9 : vector<1x8x4xbf16> to vector<8x4xbf16>
    %cst_11 = arith.constant dense<0.000000e+00> : vector<8x288xf32>
    %11 = tpu.matmul %10, %8, %cst_11 {dimension_numbers = #tpu.dot_dimension_numbers<[1], [0], [0], [1], [0, 0, 1, 1], [], []>} : vector<8x4xbf16>, vector<4x288xbf16>, vector<8x288xf32> -> vector<8x288xf32>
    %12 = arith.addf %6, %11 : vector<8x288xf32>
    %c0_12 = arith.constant 0 : index
    %c0_13 = arith.constant 0 : index
    %c2 = arith.constant 2 : index
    %13 = vector.load %arg1[%c0_12, %c0_13, %c2] : memref<1x4x326xbf16, #tpu.memory_space<vmem>>, vector<1x4x288xbf16>
    %14 = vector.shape_cast %13 : vector<1x4x288xbf16> to vector<4x288xbf16>
    %c2_14 = arith.constant 2 : index
    %c0_15 = arith.constant 0 : index
    %c0_16 = arith.constant 0 : index
    %15 = vector.load %arg2[%c2_14, %c0_15, %c0_16] : memref<9x8x4xbf16, #tpu.memory_space<vmem>>, vector<1x8x4xbf16>
    %16 = vector.shape_cast %15 : vector<1x8x4xbf16> to vector<8x4xbf16>
    %cst_17 = arith.constant dense<0.000000e+00> : vector<8x288xf32>
    %17 = tpu.matmul %16, %14, %cst_17 {dimension_numbers = #tpu.dot_dimension_numbers<[1], [0], [0], [1], [0, 0, 1, 1], [], []>} : vector<8x4xbf16>, vector<4x288xbf16>, vector<8x288xf32> -> vector<8x288xf32>
    %18 = arith.addf %12, %17 : vector<8x288xf32>
    %c0_18 = arith.constant 0 : index
    %c0_19 = arith.constant 0 : index
    %c18 = arith.constant 18 : index
    %19 = vector.load %arg1[%c0_18, %c0_19, %c18] : memref<1x4x326xbf16, #tpu.memory_space<vmem>>, vector<1x4x288xbf16>
    %20 = vector.shape_cast %19 : vector<1x4x288xbf16> to vector<4x288xbf16>
    %c3 = arith.constant 3 : index
    %c0_20 = arith.constant 0 : index
    %c0_21 = arith.constant 0 : index
    %21 = vector.load %arg2[%c3, %c0_20, %c0_21] : memref<9x8x4xbf16, #tpu.memory_space<vmem>>, vector<1x8x4xbf16>
    %22 = vector.shape_cast %21 : vector<1x8x4xbf16> to vector<8x4xbf16>
    %cst_22 = arith.constant dense<0.000000e+00> : vector<8x288xf32>
    %23 = tpu.matmul %22, %20, %cst_22 {dimension_numbers = #tpu.dot_dimension_numbers<[1], [0], [0], [1], [0, 0, 1, 1], [], []>} : vector<8x4xbf16>, vector<4x288xbf16>, vector<8x288xf32> -> vector<8x288xf32>
    %24 = arith.addf %18, %23 : vector<8x288xf32>
    %c0_23 = arith.constant 0 : index
    %c0_24 = arith.constant 0 : index
    %c19 = arith.constant 19 : index
    %25 = vector.load %arg1[%c0_23, %c0_24, %c19] : memref<1x4x326xbf16, #tpu.memory_space<vmem>>, vector<1x4x288xbf16>
    %26 = vector.shape_cast %25 : vector<1x4x288xbf16> to vector<4x288xbf16>
    %c4 = arith.constant 4 : index
    %c0_25 = arith.constant 0 : index
    %c0_26 = arith.constant 0 : index
    %27 = vector.load %arg2[%c4, %c0_25, %c0_26] : memref<9x8x4xbf16, #tpu.memory_space<vmem>>, vector<1x8x4xbf16>
    %28 = vector.shape_cast %27 : vector<1x8x4xbf16> to vector<8x4xbf16>
    %cst_27 = arith.constant dense<0.000000e+00> : vector<8x288xf32>
    %29 = tpu.matmul %28, %26, %cst_27 {dimension_numbers = #tpu.dot_dimension_numbers<[1], [0], [0], [1], [0, 0, 1, 1], [], []>} : vector<8x4xbf16>, vector<4x288xbf16>, vector<8x288xf32> -> vector<8x288xf32>
    %30 = arith.addf %24, %29 : vector<8x288xf32>
    %c0_28 = arith.constant 0 : index
    %c0_29 = arith.constant 0 : index
    %c20 = arith.constant 20 : index
    %31 = vector.load %arg1[%c0_28, %c0_29, %c20] : memref<1x4x326xbf16, #tpu.memory_space<vmem>>, vector<1x4x288xbf16>
    %32 = vector.shape_cast %31 : vector<1x4x288xbf16> to vector<4x288xbf16>
    %c5 = arith.constant 5 : index
    %c0_30 = arith.constant 0 : index
    %c0_31 = arith.constant 0 : index
    %33 = vector.load %arg2[%c5, %c0_30, %c0_31] : memref<9x8x4xbf16, #tpu.memory_space<vmem>>, vector<1x8x4xbf16>
    %34 = vector.shape_cast %33 : vector<1x8x4xbf16> to vector<8x4xbf16>
    %cst_32 = arith.constant dense<0.000000e+00> : vector<8x288xf32>
    %35 = tpu.matmul %34, %32, %cst_32 {dimension_numbers = #tpu.dot_dimension_numbers<[1], [0], [0], [1], [0, 0, 1, 1], [], []>} : vector<8x4xbf16>, vector<4x288xbf16>, vector<8x288xf32> -> vector<8x288xf32>
    %36 = arith.addf %30, %35 : vector<8x288xf32>
    %c0_33 = arith.constant 0 : index
    %c0_34 = arith.constant 0 : index
    %c36 = arith.constant 36 : index
    %37 = vector.load %arg1[%c0_33, %c0_34, %c36] : memref<1x4x326xbf16, #tpu.memory_space<vmem>>, vector<1x4x288xbf16>
    %38 = vector.shape_cast %37 : vector<1x4x288xbf16> to vector<4x288xbf16>
    %c6 = arith.constant 6 : index
    %c0_35 = arith.constant 0 : index
    %c0_36 = arith.constant 0 : index
    %39 = vector.load %arg2[%c6, %c0_35, %c0_36] : memref<9x8x4xbf16, #tpu.memory_space<vmem>>, vector<1x8x4xbf16>
    %40 = vector.shape_cast %39 : vector<1x8x4xbf16> to vector<8x4xbf16>
    %cst_37 = arith.constant dense<0.000000e+00> : vector<8x288xf32>
    %41 = tpu.matmul %40, %38, %cst_37 {dimension_numbers = #tpu.dot_dimension_numbers<[1], [0], [0], [1], [0, 0, 1, 1], [], []>} : vector<8x4xbf16>, vector<4x288xbf16>, vector<8x288xf32> -> vector<8x288xf32>
    %42 = arith.addf %36, %41 : vector<8x288xf32>
    %c0_38 = arith.constant 0 : index
    %c0_39 = arith.constant 0 : index
    %c37 = arith.constant 37 : index
    %43 = vector.load %arg1[%c0_38, %c0_39, %c37] : memref<1x4x326xbf16, #tpu.memory_space<vmem>>, vector<1x4x288xbf16>
    %44 = vector.shape_cast %43 : vector<1x4x288xbf16> to vector<4x288xbf16>
    %c7 = arith.constant 7 : index
    %c0_40 = arith.constant 0 : index
    %c0_41 = arith.constant 0 : index
    %45 = vector.load %arg2[%c7, %c0_40, %c0_41] : memref<9x8x4xbf16, #tpu.memory_space<vmem>>, vector<1x8x4xbf16>
    %46 = vector.shape_cast %45 : vector<1x8x4xbf16> to vector<8x4xbf16>
    %cst_42 = arith.constant dense<0.000000e+00> : vector<8x288xf32>
    %47 = tpu.matmul %46, %44, %cst_42 {dimension_numbers = #tpu.dot_dimension_numbers<[1], [0], [0], [1], [0, 0, 1, 1], [], []>} : vector<8x4xbf16>, vector<4x288xbf16>, vector<8x288xf32> -> vector<8x288xf32>
    %48 = arith.addf %42, %47 : vector<8x288xf32>
    %c0_43 = arith.constant 0 : index
    %c0_44 = arith.constant 0 : index
    %c38 = arith.constant 38 : index
    %49 = vector.load %arg1[%c0_43, %c0_44, %c38] : memref<1x4x326xbf16, #tpu.memory_space<vmem>>, vector<1x4x288xbf16>
    %50 = vector.shape_cast %49 : vector<1x4x288xbf16> to vector<4x288xbf16>
    %c8 = arith.constant 8 : index
    %c0_45 = arith.constant 0 : index
    %c0_46 = arith.constant 0 : index
    %51 = vector.load %arg2[%c8, %c0_45, %c0_46] : memref<9x8x4xbf16, #tpu.memory_space<vmem>>, vector<1x8x4xbf16>
    %52 = vector.shape_cast %51 : vector<1x8x4xbf16> to vector<8x4xbf16>
    %cst_47 = arith.constant dense<0.000000e+00> : vector<8x288xf32>
    %53 = tpu.matmul %52, %50, %cst_47 {dimension_numbers = #tpu.dot_dimension_numbers<[1], [0], [0], [1], [0, 0, 1, 1], [], []>} : vector<8x4xbf16>, vector<4x288xbf16>, vector<8x288xf32> -> vector<8x288xf32>
    %54 = arith.addf %48, %53 : vector<8x288xf32>
    %c0_48 = arith.constant 0 : index
    %c0_49 = arith.constant 0 : index
    %55 = vector.load %arg3[%c0_48, %c0_49] : memref<1x288xf32, #tpu.memory_space<vmem>>, vector<1x288xf32>
    %56 = vector.broadcast %55 : vector<1x288xf32> to vector<8x288xf32>
    %57 = arith.mulf %54, %56 : vector<8x288xf32>
    %cst_50 = arith.constant dense<0.000000e+00> : vector<8xf32>
    %58 = vector.multi_reduction <add>, %57, %cst_50 [1] : vector<8x288xf32> to vector<8xf32>
    %59 = vector.shape_cast %58 : vector<8xf32> to vector<8x1xf32>
    %cst_51 = arith.constant 3.906250e-03 : f32
    %60 = vector.broadcast %cst_51 : f32 to vector<8x1xf32>
    %61 = arith.mulf %59, %60 : vector<8x1xf32>
    %62 = vector.broadcast %61 : vector<8x1xf32> to vector<8x288xf32>
    %63 = arith.subf %54, %62 : vector<8x288xf32>
    %64 = arith.mulf %63, %63 : vector<8x288xf32>
    %65 = vector.broadcast %55 : vector<1x288xf32> to vector<8x288xf32>
    %66 = arith.mulf %64, %65 : vector<8x288xf32>
    %cst_52 = arith.constant dense<0.000000e+00> : vector<8xf32>
    %67 = vector.multi_reduction <add>, %66, %cst_52 [1] : vector<8x288xf32> to vector<8xf32>
    %68 = vector.shape_cast %67 : vector<8xf32> to vector<8x1xf32>
    %cst_53 = arith.constant 3.906250e-03 : f32
    %69 = vector.broadcast %cst_53 : f32 to vector<8x1xf32>
    %70 = arith.mulf %68, %69 : vector<8x1xf32>
    %cst_54 = arith.constant 9.99999974E-6 : f32
    %71 = vector.broadcast %cst_54 : f32 to vector<8x1xf32>
    %72 = arith.addf %70, %71 : vector<8x1xf32>
    %73 = math.rsqrt %72 : vector<8x1xf32>
    %74 = vector.broadcast %73 : vector<8x1xf32> to vector<8x288xf32>
    %75 = arith.mulf %63, %74 : vector<8x288xf32>
    %cst_55 = arith.constant 0.000000e+00 : f32
    %76 = vector.broadcast %cst_55 : f32 to vector<8x288xf32>
    %77 = arith.maximumf %75, %76 : vector<8x288xf32>
    %c0_56 = arith.constant 0 : index
    %c0_57 = arith.constant 0 : index
    %c0_58 = arith.constant 0 : index
    %78 = vector.load %arg4[%c0_56, %c0_57, %c0_58] : memref<1x8x288xf32, #tpu.memory_space<vmem>>, vector<1x8x288xf32>
    %79 = vector.shape_cast %78 : vector<1x8x288xf32> to vector<8x288xf32>
    %80 = vector.shape_cast %77 : vector<8x288xf32> to vector<1x8x288xf32>
    tpu.vector_store %arg4[%c0_56, %c0_57, %c0_58], %80 {strides = array<i32>} : memref<1x8x288xf32, #tpu.memory_space<vmem>>, vector<1x8x288xf32>,
    return
  }
  func.func @transform_0(%arg0: i32) -> (i32, i32, i32) {
    %c0_i32 = arith.constant 0 : i32
    %c0_i32_0 = arith.constant 0 : i32
    %c0_i32_1 = arith.constant 0 : i32
    return %arg0, %c0_i32, %c0_i32_0 : i32, i32, i32
  }
  func.func @transform_1(%arg0: i32) -> (i32, i32, i32) {
    %c0_i32 = arith.constant 0 : i32
    %c0_i32_0 = arith.constant 0 : i32
    %c0_i32_1 = arith.constant 0 : i32
    %c0_i32_2 = arith.constant 0 : i32
    return %c0_i32, %c0_i32_0, %c0_i32_1 : i32, i32, i32
  }
  func.func @transform_2(%arg0: i32) -> (i32, i32) {
    %c0_i32 = arith.constant 0 : i32
    %c0_i32_0 = arith.constant 0 : i32
    %c0_i32_1 = arith.constant 0 : i32
    return %c0_i32, %c0_i32_0 : i32, i32
  }
  func.func @transform_3(%arg0: i32) -> (i32, i32, i32) {
    %c0_i32 = arith.constant 0 : i32
    %c0_i32_0 = arith.constant 0 : i32
    %c0_i32_1 = arith.constant 0 : i32
    return %arg0, %c0_i32, %c0_i32_0 : i32, i32, i32
  }
}

</mosaic_0001>

<llo_original>
// kernel: tpu_custom_call.1
$region0: #{tpu_custom_call.1}
  #allocation0 [shape = 'u32[]', space=smem, size = 0x4, offset = 0x4, fixed_abs, tag = 'smem constant byte address 0x4 - core index']
  #allocation1 [shape = 'u32[144,128]{1,0:T(1,128)}', space=vmem, size = 0x12000, scoped, tag = 'internal scratch']
  %s0 = inlined_call_operand.vmem [shape: bf16[2,4,326], index: 0, kind: input, shape index: {}]
  %s1 = inlined_call_operand.vmem [shape: bf16[9,8,4], index: 1, kind: input, shape index: {}]
  %s2 = inlined_call_operand.vmem [shape: f32[1,288], index: 2, kind: input, shape index: {}]
  %s3 = inlined_call_operand.hbm [shape: f32[2,8,288], index: 3, kind: output, shape index: {}]
  %s4 = sld [smem:[#allocation0]]
  $region45: #{tpu_custom_call.1} parent=0
    _
  %s6 = ssub.s32 1, %s4
  %s7 = scalar_select 0, %s6, %s4
  $region1: #{tpu_custom_call.1} parent=0
    #allocation2 [shape = 'u8[24576]{0}', space=vmem, size = 0x6000, scoped, tag = 'output window, operand 0']
    #allocation3 [shape = 's32[2]{0}', space=sflag, size = 0x8, scoped, tag = 'scoped memory for tpu_custom_call.1']
    %8 = vsyncpa [#allocation3], 0
    %s9 = scalar_lea.sflag [#allocation3], 1
    %10 = vsyncpa %s9, 0
    loop: start=0, step=1, limit=4
    $region2: #{tpu_custom_call.1} parent=1 // loop_pre_header
      _
    $region3: #{tpu_custom_call.1} parent=1 // loop_header
      %s12 = sphi 0, %s16
      %p13 = scmp.ge.s32.totalorder %s12, 4
      %s22 = sphi 0, %s24
      %s25 = sphi 0, %s22
      %s26 = sphi 0, %s25
      %s42 = sphi 0, %s26
      %s46 = sphi 0, %s46
      %s48 = sphi 0, %s46
      %s49 = sphi 0, %s48
      %s63 = sphi 0, %s49
      %s67 = sphi 0, %s67
      %s69 = sphi 0, %s67
      %s70 = sphi 0, %s69
      %s84 = sphi 0, %s70
      %s90 = sphi 0, %s92
      %s93 = sphi 0, %s90
      %s94 = sphi 0, %s93
      %s110 = sphi 0, %s94
    $region4: #{tpu_custom_call.1} parent=1 // loop_header_branch
      %15 = sbr.rel (%p13) target = $region8
    $region5: #{tpu_custom_call.1} parent=1 // loop_body
      %s17 = ssub.s32 %s12, 1
      %s18 = ssub.s32 %s12, 2
      %s19 = sadd.s32 %s12, 1
      %s20 = ssub.s32 %s12, %s19
      %p21 = scmp.eq.s32.totalorder %s20, 0
      %s23 = sadd.s32 %s22, 1
      %s24 = scalar_select %p21, %s22, %s23
      %p27 = pneg %p21
      %p28 = scmp.eq.s32.totalorder %s12, 1
      %p29 = por %p27, %p28
      %p30 = scmp.ne.s32.totalorder %s22, %s25
      %p31 = scmp.eq.s32.totalorder %s12, 0
      %p32 = por %p30, %p31
      %p33 = scmp.ne.s32.totalorder %s22, %s25
      %p34 = scmp.eq.s32.totalorder %s17, 1
      %p35 = por %p33, %p34
      %p36 = scmp.ne.s32.totalorder %s25, %s26
      %p37 = scmp.eq.s32.totalorder %s17, 0
      %p38 = por %p36, %p37
      %p39 = scmp.ne.s32.totalorder %s25, %s26
      %p40 = scmp.eq.s32.totalorder %s18, 1
      %p41 = por %p39, %p40
      %p43 = scmp.ne.s32.totalorder %s26, %s42
      %p44 = scmp.eq.s32.totalorder %s18, 0
      %p45 = por %p43, %p44
      %s47 = sadd.s32 %s46, 1
      %p50 = scmp.eq.s32.totalorder %s12, 1
      %p51 = scmp.ne.s32.totalorder %s46, %s48
      %p52 = scmp.eq.s32.totalorder %s12, 0
      %p53 = por %p51, %p52
      %p54 = scmp.ne.s32.totalorder %s46, %s48
      %p55 = scmp.eq.s32.totalorder %s17, 1
      %p56 = por %p54, %p55
      %p57 = scmp.ne.s32.totalorder %s48, %s49
      %p58 = scmp.eq.s32.totalorder %s17, 0
      %p59 = por %p57, %p58
      %p60 = scmp.ne.s32.totalorder %s48, %s49
      %p61 = scmp.eq.s32.totalorder %s18, 1
      %p62 = por %p60, %p61
      %p64 = scmp.ne.s32.totalorder %s49, %s63
      %p65 = scmp.eq.s32.totalorder %s18, 0
      %p66 = por %p64, %p65
      %s68 = sadd.s32 %s67, 1
      %p71 = scmp.eq.s32.totalorder %s12, 1
      %p72 = scmp.ne.s32.totalorder %s67, %s69
      %p73 = scmp.eq.s32.totalorder %s12, 0
      %p74 = por %p72, %p73
      %p75 = scmp.ne.s32.totalorder %s67, %s69
      %p76 = scmp.eq.s32.totalorder %s17, 1
      %p77 = por %p75, %p76
      %p78 = scmp.ne.s32.totalorder %s69, %s70
      %p79 = scmp.eq.s32.totalorder %s17, 0
      %p80 = por %p78, %p79
      %p81 = scmp.ne.s32.totalorder %s69, %s70
      %p82 = scmp.eq.s32.totalorder %s18, 1
      %p83 = por %p81, %p82
      %p85 = scmp.ne.s32.totalorder %s70, %s84
      %p86 = scmp.eq.s32.totalorder %s18, 0
      %p87 = por %p85, %p86
      %s88 = ssub.s32 %s12, %s19
      %p89 = scmp.eq.s32.totalorder %s88, 0
      %s91 = sadd.s32 %s90, 1
      %s92 = scalar_select %p89, %s90, %s91
      %p95 = pneg %p89
      %p96 = scmp.eq.s32.totalorder %s12, 1
      %p97 = por %p95, %p96
      %p98 = scmp.ne.s32.totalorder %s90, %s93
      %p99 = scmp.eq.s32.totalorder %s12, 0
      %p100 = por %p98, %p99
      %p101 = scmp.ne.s32.totalorder %s90, %s93
      %p102 = scmp.eq.s32.totalorder %s17, 1
      %p103 = por %p101, %p102
      %p104 = scmp.ne.s32.totalorder %s93, %s94
      %p105 = scmp.eq.s32.totalorder %s17, 0
      %p106 = por %p104, %p105
      %p107 = scmp.ne.s32.totalorder %s93, %s94
      %p108 = scmp.eq.s32.totalorder %s18, 1
      %p109 = por %p107, %p108
      %p111 = scmp.ne.s32.totalorder %s94, %s110
      %p112 = scmp.eq.s32.totalorder %s18, 0
      %p113 = por %p111, %p112
      %p114 = scmp.le.s32.totalorder 1, %s12
      %p115 = scmp.lt.s32.totalorder %s12, 3
      %p116 = pnand %p114, %p115
      %p117 = pneg %p116
      // Predicated region
      $region9: #{tpu_custom_call.1} parent=5 // pred_check
        _
      $region10: #{tpu_custom_call.1} parent=5 // pred_check_branch
        %119 = sbr.rel (%p116) target = $region12
      $region11: #{tpu_custom_call.1} parent=5 // pred_region
        %s120 = ssub.s32 %s12, 1
        // Predicated region
        $region13: #{tpu_custom_call.1} parent=11 // pred_check
          %p121 = pneg %p59
        $region14: #{tpu_custom_call.1} parent=11 // pred_check_branch
          %123 = sbr.rel (%p121) target = $region16
        $region15: #{tpu_custom_call.1} parent=11 // pred_region
          _
        $region16: #{tpu_custom_call.1} parent=11 // pred_fallthru
          _
        // Predicated region
        $region17: #{tpu_custom_call.1} parent=11 // pred_check
          %p124 = pneg %p80
        $region18: #{tpu_custom_call.1} parent=11 // pred_check_branch
          %126 = sbr.rel (%p124) target = $region20
        $region19: #{tpu_custom_call.1} parent=11 // pred_region
          _
        $region20: #{tpu_custom_call.1} parent=11 // pred_fallthru
          _
      $region12: #{tpu_custom_call.1} parent=5 // pred_fallthru
        _
      %p127 = scmp.lt.s32.totalorder %s12, 2
      // Predicated region
      $region21: #{tpu_custom_call.1} parent=5 // pred_check
        %p128 = pneg %p127
      $region22: #{tpu_custom_call.1} parent=5 // pred_check_branch
        %130 = sbr.rel (%p128) target = $region24
      $region23: #{tpu_custom_call.1} parent=5 // pred_region
        // Predicated region
        $region25: #{tpu_custom_call.1} parent=23 // pred_check
          %p131 = pneg %p32
        $region26: #{tpu_custom_call.1} parent=23 // pred_check_branch
          %133 = sbr.rel (%p131) target = $region28
        $region27: #{tpu_custom_call.1} parent=23 // pred_region
          %p134 = scmp.lt.s32.totalorder %s12, 1
          %s135 = scalar_select %p134, %s12, 1
          %s136 = smul.addr %s135, 3
          %s137 = smul.addr %s136, 2
          %s138 = scalar_lea.vmem %s0, %s137
        $region28: #{tpu_custom_call.1} parent=23 // pred_fallthru
          _
      $region24: #{tpu_custom_call.1} parent=5 // pred_fallthru
        _
      %p139 = scmp.le.s32.totalorder 1, %s12
      %p140 = scmp.lt.s32.totalorder %s12, 3
      %p141 = pnand %p139, %p140
      %p142 = pneg %p141
      // Predicated region
      $region29: #{tpu_custom_call.1} parent=5 // pred_check
        _
      $region30: #{tpu_custom_call.1} parent=5 // pred_check_branch
        %144 = sbr.rel (%p141) target = $region32
      $region31: #{tpu_custom_call.1} parent=5 // pred_region
        %s145 = ssub.s32 %s12, 1
        %p146 = scmp.lt.s32.totalorder %s17, 1
        %s147 = scalar_select %p146, %s17, 1
        %s148 = smul.addr %s147, 3
        %s149 = smul.addr %s148, 2
        %s150 = scalar_lea.vmem %s0, %s149
        %p151 = pneg %p38
        %p152 = pneg %p35
        %p153 = pneg %p59
        %p154 = pneg %p56
        %p155 = pneg %p80
        %p156 = pneg %p77
        %p157 = pneg %p106
        %p158 = pneg %p103
        %s159 = sand.u32 %s93, 1
        %s160 = scalar_lea.sflag [#allocation3], %s159
        %s161 = sand.u32 %s93, 1
        %s162 = smul.addr %s161, 24
        %s163 = scalar_lea.vmem [#allocation2], %s162
        %p164 = scmp.lt.s32.totalorder %s17, 1
        %s165 = scalar_select %p164, %s17, 1
        %s166 = smul.addr %s165, 3
        %s167 = smul.addr %s166, 2
        %s168 = scalar_lea.vmem %s0, %s167
        %v170 = vld [vmem:[%s168] sm:$0x3f]
        %v171 = vld [vmem:[%s1] sm:$0xf]
        %s172 = scalar_lea.vmem %s1, 4
        %v173 = vld [vmem:[%s172] sm:$0xf]
        %v175 = vcombine.high %v170, %v170
        %v177 = vunpack.c.l.s4 1983009808
        %v178 = vunpack.c.0.s8 %v177
        %v179 = vlaneseq
        %v180 = vshrl.u32 %v179, 7
        %v181 = vsub.s32 %v178, %v180
        %v182 = vrot.slane %v170, %v181
        %v184 = vunpack.c.l.s4 1983009808
        %v185 = vunpack.c.0.s8 %v184
        %v186 = vlaneseq
        %v187 = vshrl.u32 %v186, 7
        %v188 = vsub.s32 %v185, %v187
        %v189 = vrot.slane %v175, %v188
        %v190 = vcombine.high %v182, %v182
        %191 = vrot.lane.b32.xlu0 %v182, 127
        %v192 = vpop.permute.xlu0 %191
        %193 = vrot.lane.b32.xlu0 %v190, 127
        %v194 = vpop.permute.xlu0 %193
        %195 = vrot.lane.b32.xlu0 %v189, 127
        %v196 = vpop.permute.xlu0 %195
        %vm197 = vcmask 1039360
        %v198 = vsel %vm197, %v192, %v194
        %v199 = vsel %vm197, %v194, %v196
        %vm200 = vcmask 31744
        %v202 = vsel %vm200, %v173, 0
        %vm204 = vcmask 1041408
        %v206 = vsel %vm204, %v198, 0
        %v209 = vsel %vm204, %v199, 0
        %v212 = vsel %vm204, %v196, 0
        %214 = vmatprep.subr.bf16.mxu0 %v209
        %215 = vmatpush1.bf16.msra.mxu0 %v206
        %216 = vmatprep.subr.bf16.mxu0 0
        %217 = vmatpush1.bf16.msra.mxu0 0
        %218 = vmatprep.subr.bf16.mxu0 0
        %219 = vmatpush1.bf16.msra.mxu0 0
        %220 = vmatprep.subr.bf16.mxu0 0
        %221 = vmatpush1.bf16.msra.mxu0 0
        %222 = vmatprep.subr.bf16.mxu0 0
        %223 = vmatpush1.bf16.msra.mxu0 0
        %224 = vmatprep.subr.bf16.mxu0 0
        %225 = vmatpush1.bf16.msra.mxu0 0
        %226 = vmatprep.subr.bf16.mxu0 0
        %227 = vmatpush1.bf16.msra.mxu0 0
        %228 = vmatprep.subr.bf16.mxu0 0
        %229 = vmatpush1.bf16.msra.mxu0 0
        %230 = vmatprep.subr.bf16.mxu0 0
        %231 = vmatpush1.bf16.msra.mxu0 0
        %232 = vmatprep.subr.bf16.mxu0 0
        %233 = vmatpush1.bf16.msra.mxu0 0
        %234 = vmatprep.subr.bf16.mxu0 0
        %235 = vmatpush1.bf16.msra.mxu0 0
        %236 = vmatprep.subr.bf16.mxu0 0
        %237 = vmatpush1.bf16.msra.mxu0 0
        %238 = vmatprep.subr.bf16.mxu0 0
        %239 = vmatpush1.bf16.msra.mxu0 0
        %240 = vmatprep.subr.bf16.mxu0 0
        %241 = vmatpush1.bf16.msra.mxu0 0
        %242 = vmatprep.subr.bf16.mxu0 0
        %243 = vmatpush1.bf16.msra.mxu0 0
        %244 = vmatprep.subr.bf16.mxu0 0
        %245 = vmatpush1.bf16.msra.mxu0 0
        %246 = vmatprep.mubr.bf16.mxu0 0
        %247 = vmatmul.mubr.bf16.gmra.mrb[0].mxu0 %v202
        %v248 = vpop.f32.mrb[0].mxu0
        %v249 = vadd.f32 0.0, %v248
        %v250 = vpop.f32.mrb[0].mxu0
        %v251 = vadd.f32 0.0, %v250
        %v252 = vpop.f32.mrb[0].mxu0
        %v253 = vpop.f32.mrb[0].mxu0
        %254 = vdwg.mxu0
        %255 = vmatprep.subr.bf16.mxu0 0
        %256 = vmatpush1.bf16.msra.mxu0 %v212
        %257 = vmatprep.subr.bf16.mxu0 0
        %258 = vmatpush1.bf16.msra.mxu0 0
        %259 = vmatprep.subr.bf16.mxu0 0
        %260 = vmatpush1.bf16.msra.mxu0 0
        %261 = vmatprep.subr.bf16.mxu0 0
        %262 = vmatpush1.bf16.msra.mxu0 0
        %263 = vmatprep.subr.bf16.mxu0 0
        %264 = vmatpush1.bf16.msra.mxu0 0
        %265 = vmatprep.subr.bf16.mxu0 0
        %266 = vmatpush1.bf16.msra.mxu0 0
        %267 = vmatprep.subr.bf16.mxu0 0
        %268 = vmatpush1.bf16.msra.mxu0 0
        %269 = vmatprep.subr.bf16.mxu0 0
        %270 = vmatpush1.bf16.msra.mxu0 0
        %271 = vmatprep.subr.bf16.mxu0 0
        %272 = vmatpush1.bf16.msra.mxu0 0
        %273 = vmatprep.subr.bf16.mxu0 0
        %274 = vmatpush1.bf16.msra.mxu0 0
        %275 = vmatprep.subr.bf16.mxu0 0
        %276 = vmatpush1.bf16.msra.mxu0 0
        %277 = vmatprep.subr.bf16.mxu0 0
        %278 = vmatpush1.bf16.msra.mxu0 0
        %279 = vmatprep.subr.bf16.mxu0 0
        %280 = vmatpush1.bf16.msra.mxu0 0
        %281 = vmatprep.subr.bf16.mxu0 0
        %282 = vmatpush1.bf16.msra.mxu0 0
        %283 = vmatprep.subr.bf16.mxu0 0
        %284 = vmatpush1.bf16.msra.mxu0 0
        %285 = vmatprep.subr.bf16.mxu0 0
        %286 = vmatpush1.bf16.msra.mxu0 0
        %287 = vmatprep.mubr.bf16.mxu0 0
        %288 = vmatmul.mubr.bf16.gmra.mrb[0].mxu0 %v202
        %v289 = vpop.f32.mrb[0].mxu0
        %v290 = vadd.f32 0.0, %v289
        %v291 = vpop.f32.mrb[0].mxu0
        %v292 = vpop.f32.mrb[0].mxu0
        %v293 = vpop.f32.mrb[0].mxu0
        %294 = vdwg.mxu0
        %v296 = vsel %vm200, %v171, 0
        %v299 = vsel %vm204, %v182, 0
        %v302 = vsel %vm204, %v190, 0
        %v305 = vsel %vm204, %v189, 0
        %307 = vmatprep.subr.bf16.mxu0 %v302
        %308 = vmatpush1.bf16.msra.mxu0 %v299
        %309 = vmatprep.subr.bf16.mxu0 0
        %310 = vmatpush1.bf16.msra.mxu0 0
        %311 = vmatprep.subr.bf16.mxu0 0
        %312 = vmatpush1.bf16.msra.mxu0 0
        %313 = vmatprep.subr.bf16.mxu0 0
        %314 = vmatpush1.bf16.msra.mxu0 0
        %315 = vmatprep.subr.bf16.mxu0 0
        %316 = vmatpush1.bf16.msra.mxu0 0
        %317 = vmatprep.subr.bf16.mxu0 0
        %318 = vmatpush1.bf16.msra.mxu0 0
        %319 = vmatprep.subr.bf16.mxu0 0
        %320 = vmatpush1.bf16.msra.mxu0 0
        %321 = vmatprep.subr.bf16.mxu0 0
        %322 = vmatpush1.bf16.msra.mxu0 0
        %323 = vmatprep.subr.bf16.mxu0 0
        %324 = vmatpush1.bf16.msra.mxu0 0
        %325 = vmatprep.subr.bf16.mxu0 0
        %326 = vmatpush1.bf16.msra.mxu0 0
        %327 = vmatprep.subr.bf16.mxu0 0
        %328 = vmatpush1.bf16.msra.mxu0 0
        %329 = vmatprep.subr.bf16.mxu0 0
        %330 = vmatpush1.bf16.msra.mxu0 0
        %331 = vmatprep.subr.bf16.mxu0 0
        %332 = vmatpush1.bf16.msra.mxu0 0
        %333 = vmatprep.subr.bf16.mxu0 0
        %334 = vmatpush1.bf16.msra.mxu0 0
        %335 = vmatprep.subr.bf16.mxu0 0
        %336 = vmatpush1.bf16.msra.mxu0 0
        %337 = vmatprep.subr.bf16.mxu0 0
        %338 = vmatpush1.bf16.msra.mxu0 0
        %339 = vmatprep.mubr.bf16.mxu0 0
        %340 = vmatmul.mubr.bf16.gmra.mrb[0].mxu0 %v296
        %v341 = vpop.f32.mrb[0].mxu0
        %v342 = vadd.f32 %v249, %v341
        %v343 = vpop.f32.mrb[0].mxu0
        %v344 = vadd.f32 %v251, %v343
        %v345 = vpop.f32.mrb[0].mxu0
        %v346 = vpop.f32.mrb[0].mxu0
        %347 = vdwg.mxu0
        %348 = vmatprep.subr.bf16.mxu0 0
        %349 = vmatpush1.bf16.msra.mxu0 %v305
        %350 = vmatprep.subr.bf16.mxu0 0
        %351 = vmatpush1.bf16.msra.mxu0 0
        %352 = vmatprep.subr.bf16.mxu0 0
        %353 = vmatpush1.bf16.msra.mxu0 0
        %354 = vmatprep.subr.bf16.mxu0 0
        %355 = vmatpush1.bf16.msra.mxu0 0
        %356 = vmatprep.subr.bf16.mxu0 0
        %357 = vmatpush1.bf16.msra.mxu0 0
        %358 = vmatprep.subr.bf16.mxu0 0
        %359 = vmatpush1.bf16.msra.mxu0 0
        %360 = vmatprep.subr.bf16.mxu0 0
        %361 = vmatpush1.bf16.msra.mxu0 0
        %362 = vmatprep.subr.bf16.mxu0 0
        %363 = vmatpush1.bf16.msra.mxu0 0
        %364 = vmatprep.subr.bf16.mxu0 0
        %365 = vmatpush1.bf16.msra.mxu0 0
        %366 = vmatprep.subr.bf16.mxu0 0
        %367 = vmatpush1.bf16.msra.mxu0 0
        %368 = vmatprep.subr.bf16.mxu0 0
        %369 = vmatpush1.bf16.msra.mxu0 0
        %370 = vmatprep.subr.bf16.mxu0 0
        %371 = vmatpush1.bf16.msra.mxu0 0
        %372 = vmatprep.subr.bf16.mxu0 0
        %373 = vmatpush1.bf16.msra.mxu0 0
        %374 = vmatprep.subr.bf16.mxu0 0
        %375 = vmatpush1.bf16.msra.mxu0 0
        %376 = vmatprep.subr.bf16.mxu0 0
        %377 = vmatpush1.bf16.msra.mxu0 0
        %378 = vmatprep.subr.bf16.mxu0 0
        %379 = vmatpush1.bf16.msra.mxu0 0
        %380 = vmatprep.mubr.bf16.mxu0 0
        %381 = vmatmul.mubr.bf16.gmra.mrb[0].mxu0 %v296
        %v382 = vpop.f32.mrb[0].mxu0
        %v383 = vadd.f32 %v290, %v382
        %v384 = vpop.f32.mrb[0].mxu0
        %v385 = vpop.f32.mrb[0].mxu0
        %v386 = vpop.f32.mrb[0].mxu0
        %387 = vdwg.mxu0
        %v388 = vld [vmem:[%s168] sm:$0x3f]
        %s389 = scalar_lea.vmem %s1, 8
        %v390 = vld [vmem:[%s389] sm:$0xf]
        %v392 = vcombine.high %v388, %v388
        %v394 = vunpack.c.l.s4 1983009808
        %v395 = vunpack.c.0.s8 %v394
        %v396 = vlaneseq
        %v397 = vshrl.u32 %v396, 7
        %v398 = vsub.s32 %v395, %v397
        %v399 = vrot.slane %v388, %v398
        %v401 = vunpack.c.l.s4 1983009808
        %v402 = vunpack.c.0.s8 %v401
        %v403 = vlaneseq
        %v404 = vshrl.u32 %v403, 7
        %v405 = vsub.s32 %v402, %v404
        %v406 = vrot.slane %v392, %v405
        %v407 = vcombine.high %v399, %v399
        %408 = vrot.lane.b32.xlu0 %v399, 126
        %v409 = vpop.permute.xlu0 %408
        %410 = vrot.lane.b32.xlu0 %v407, 126
        %v411 = vpop.permute.xlu0 %410
        %412 = vrot.lane.b32.xlu0 %v406, 126
        %v413 = vpop.permute.xlu0 %412
        %vm414 = vcmask 1031168
        %v415 = vsel %vm414, %v409, %v411
        %v416 = vsel %vm414, %v411, %v413
        %v418 = vsel %vm200, %v390, 0
        %v421 = vsel %vm204, %v415, 0
        %v424 = vsel %vm204, %v416, 0
        %v427 = vsel %vm204, %v413, 0
        %429 = vmatprep.subr.bf16.mxu0 %v424
        %430 = vmatpush1.bf16.msra.mxu0 %v421
        %431 = vmatprep.subr.bf16.mxu0 0
        %432 = vmatpush1.bf16.msra.mxu0 0
        %433 = vmatprep.subr.bf16.mxu0 0
        %434 = vmatpush1.bf16.msra.mxu0 0
        %435 = vmatprep.subr.bf16.mxu0 0
        %436 = vmatpush1.bf16.msra.mxu0 0
        %437 = vmatprep.subr.bf16.mxu0 0
        %438 = vmatpush1.bf16.msra.mxu0 0
        %439 = vmatprep.subr.bf16.mxu0 0
        %440 = vmatpush1.bf16.msra.mxu0 0
        %441 = vmatprep.subr.bf16.mxu0 0
        %442 = vmatpush1.bf16.msra.mxu0 0
        %443 = vmatprep.subr.bf16.mxu0 0
        %444 = vmatpush1.bf16.msra.mxu0 0
        %445 = vmatprep.subr.bf16.mxu0 0
        %446 = vmatpush1.bf16.msra.mxu0 0
        %447 = vmatprep.subr.bf16.mxu0 0
        %448 = vmatpush1.bf16.msra.mxu0 0
        %449 = vmatprep.subr.bf16.mxu0 0
        %450 = vmatpush1.bf16.msra.mxu0 0
        %451 = vmatprep.subr.bf16.mxu0 0
        %452 = vmatpush1.bf16.msra.mxu0 0
        %453 = vmatprep.subr.bf16.mxu0 0
        %454 = vmatpush1.bf16.msra.mxu0 0
        %455 = vmatprep.subr.bf16.mxu0 0
        %456 = vmatpush1.bf16.msra.mxu0 0
        %457 = vmatprep.subr.bf16.mxu0 0
        %458 = vmatpush1.bf16.msra.mxu0 0
        %459 = vmatprep.subr.bf16.mxu0 0
        %460 = vmatpush1.bf16.msra.mxu0 0
        %461 = vmatprep.mubr.bf16.mxu0 0
        %462 = vmatmul.mubr.bf16.gmra.mrb[0].mxu0 %v418
        %v463 = vpop.f32.mrb[0].mxu0
        %v464 = vadd.f32 0.0, %v463
        %v465 = vpop.f32.mrb[0].mxu0
        %v466 = vadd.f32 0.0, %v465
        %v467 = vpop.f32.mrb[0].mxu0
        %v468 = vpop.f32.mrb[0].mxu0
        %469 = vdwg.mxu0
        %470 = vmatprep.subr.bf16.mxu0 0
        %471 = vmatpush1.bf16.msra.mxu0 %v427
        %472 = vmatprep.subr.bf16.mxu0 0
        %473 = vmatpush1.bf16.msra.mxu0 0
        %474 = vmatprep.subr.bf16.mxu0 0
        %475 = vmatpush1.bf16.msra.mxu0 0
        %476 = vmatprep.subr.bf16.mxu0 0
        %477 = vmatpush1.bf16.msra.mxu0 0
        %478 = vmatprep.subr.bf16.mxu0 0
        %479 = vmatpush1.bf16.msra.mxu0 0
        %480 = vmatprep.subr.bf16.mxu0 0
        %481 = vmatpush1.bf16.msra.mxu0 0
        %482 = vmatprep.subr.bf16.mxu0 0
        %483 = vmatpush1.bf16.msra.mxu0 0
        %484 = vmatprep.subr.bf16.mxu0 0
        %485 = vmatpush1.bf16.msra.mxu0 0
        %486 = vmatprep.subr.bf16.mxu0 0
        %487 = vmatpush1.bf16.msra.mxu0 0
        %488 = vmatprep.subr.bf16.mxu0 0
        %489 = vmatpush1.bf16.msra.mxu0 0
        %490 = vmatprep.subr.bf16.mxu0 0
        %491 = vmatpush1.bf16.msra.mxu0 0
        %492 = vmatprep.subr.bf16.mxu0 0
        %493 = vmatpush1.bf16.msra.mxu0 0
        %494 = vmatprep.subr.bf16.mxu0 0
        %495 = vmatpush1.bf16.msra.mxu0 0
        %496 = vmatprep.subr.bf16.mxu0 0
        %497 = vmatpush1.bf16.msra.mxu0 0
        %498 = vmatprep.subr.bf16.mxu0 0
        %499 = vmatpush1.bf16.msra.mxu0 0
        %500 = vmatprep.subr.bf16.mxu0 0
        %501 = vmatpush1.bf16.msra.mxu0 0
        %502 = vmatprep.mubr.bf16.mxu0 0
        %503 = vmatmul.mubr.bf16.gmra.mrb[0].mxu0 %v418
        %v504 = vpop.f32.mrb[0].mxu0
        %v505 = vadd.f32 0.0, %v504
        %v506 = vpop.f32.mrb[0].mxu0
        %v507 = vpop.f32.mrb[0].mxu0
        %v508 = vpop.f32.mrb[0].mxu0
        %509 = vdwg.mxu0
        %v510 = vadd.f32 %v342, %v464
        %v511 = vadd.f32 %v344, %v466
        %v512 = vadd.f32 %v383, %v505
        %v513 = vld [vmem:[%s168] sm:$0x3f]
        %s514 = scalar_lea.vmem %s1, 12
        %v515 = vld [vmem:[%s514] sm:$0xf]
        %v517 = vcombine.high %v513, %v513
        %v519 = vunpack.c.l.s4 1983009808
        %v520 = vunpack.c.0.s8 %v519
        %v521 = vlaneseq
        %v522 = vshrl.u32 %v521, 7
        %v523 = vsub.s32 %v520, %v522
        %v524 = vrot.slane %v513, %v523
        %v526 = vunpack.c.l.s4 1983009808
        %v527 = vunpack.c.0.s8 %v526
        %v528 = vlaneseq
        %v529 = vshrl.u32 %v528, 7
        %v530 = vsub.s32 %v527, %v529
        %v531 = vrot.slane %v517, %v530
        %v532 = vcombine.high %v524, %v524
        %533 = vrot.lane.b32.xlu0 %v524, 110
        %v534 = vpop.permute.xlu0 %533
        %535 = vrot.lane.b32.xlu0 %v532, 110
        %v536 = vpop.permute.xlu0 %535
        %537 = vrot.lane.b32.xlu0 %v531, 110
        %v538 = vpop.permute.xlu0 %537
        %vm539 = vcmask 900096
        %v540 = vsel %vm539, %v534, %v536
        %v541 = vsel %vm539, %v536, %v538
        %v543 = vsel %vm200, %v515, 0
        %v546 = vsel %vm204, %v540, 0
        %v549 = vsel %vm204, %v541, 0
        %v552 = vsel %vm204, %v538, 0
        %554 = vmatprep.subr.bf16.mxu0 %v549
        %555 = vmatpush1.bf16.msra.mxu0 %v546
        %556 = vmatprep.subr.bf16.mxu0 0
        %557 = vmatpush1.bf16.msra.mxu0 0
        %558 = vmatprep.subr.bf16.mxu0 0
        %559 = vmatpush1.bf16.msra.mxu0 0
        %560 = vmatprep.subr.bf16.mxu0 0
        %561 = vmatpush1.bf16.msra.mxu0 0
        %562 = vmatprep.subr.bf16.mxu0 0
        %563 = vmatpush1.bf16.msra.mxu0 0
        %564 = vmatprep.subr.bf16.mxu0 0
        %565 = vmatpush1.bf16.msra.mxu0 0
        %566 = vmatprep.subr.bf16.mxu0 0
        %567 = vmatpush1.bf16.msra.mxu0 0
        %568 = vmatprep.subr.bf16.mxu0 0
        %569 = vmatpush1.bf16.msra.mxu0 0
        %570 = vmatprep.subr.bf16.mxu0 0
        %571 = vmatpush1.bf16.msra.mxu0 0
        %572 = vmatprep.subr.bf16.mxu0 0
        %573 = vmatpush1.bf16.msra.mxu0 0
        %574 = vmatprep.subr.bf16.mxu0 0
        %575 = vmatpush1.bf16.msra.mxu0 0
        %576 = vmatprep.subr.bf16.mxu0 0
        %577 = vmatpush1.bf16.msra.mxu0 0
        %578 = vmatprep.subr.bf16.mxu0 0
        %579 = vmatpush1.bf16.msra.mxu0 0
        %580 = vmatprep.subr.bf16.mxu0 0
        %581 = vmatpush1.bf16.msra.mxu0 0
        %582 = vmatprep.subr.bf16.mxu0 0
        %583 = vmatpush1.bf16.msra.mxu0 0
        %584 = vmatprep.subr.bf16.mxu0 0
        %585 = vmatpush1.bf16.msra.mxu0 0
        %586 = vmatprep.mubr.bf16.mxu0 0
        %587 = vmatmul.mubr.bf16.gmra.mrb[0].mxu0 %v543
        %v588 = vpop.f32.mrb[0].mxu0
        %v589 = vadd.f32 0.0, %v588
        %v590 = vpop.f32.mrb[0].mxu0
        %v591 = vadd.f32 0.0, %v590
        %v592 = vpop.f32.mrb[0].mxu0
        %v593 = vpop.f32.mrb[0].mxu0
        %594 = vdwg.mxu0
        %595 = vmatprep.subr.bf16.mxu0 0
        %596 = vmatpush1.bf16.msra.mxu0 %v552
        %597 = vmatprep.subr.bf16.mxu0 0
        %598 = vmatpush1.bf16.msra.mxu0 0
        %599 = vmatprep.subr.bf16.mxu0 0
        %600 = vmatpush1.bf16.msra.mxu0 0
        %601 = vmatprep.subr.bf16.mxu0 0
        %602 = vmatpush1.bf16.msra.mxu0 0
        %603 = vmatprep.subr.bf16.mxu0 0
        %604 = vmatpush1.bf16.msra.mxu0 0
        %605 = vmatprep.subr.bf16.mxu0 0
        %606 = vmatpush1.bf16.msra.mxu0 0
        %607 = vmatprep.subr.bf16.mxu0 0
        %608 = vmatpush1.bf16.msra.mxu0 0
        %609 = vmatprep.subr.bf16.mxu0 0
        %610 = vmatpush1.bf16.msra.mxu0 0
        %611 = vmatprep.subr.bf16.mxu0 0
        %612 = vmatpush1.bf16.msra.mxu0 0
        %613 = vmatprep.subr.bf16.mxu0 0
        %614 = vmatpush1.bf16.msra.mxu0 0
        %615 = vmatprep.subr.bf16.mxu0 0
        %616 = vmatpush1.bf16.msra.mxu0 0
        %617 = vmatprep.subr.bf16.mxu0 0
        %618 = vmatpush1.bf16.msra.mxu0 0
        %619 = vmatprep.subr.bf16.mxu0 0
        %620 = vmatpush1.bf16.msra.mxu0 0
        %621 = vmatprep.subr.bf16.mxu0 0
        %622 = vmatpush1.bf16.msra.mxu0 0
        %623 = vmatprep.subr.bf16.mxu0 0
        %624 = vmatpush1.bf16.msra.mxu0 0
        %625 = vmatprep.subr.bf16.mxu0 0
        %626 = vmatpush1.bf16.msra.mxu0 0
        %627 = vmatprep.mubr.bf16.mxu0 0
        %628 = vmatmul.mubr.bf16.gmra.mrb[0].mxu0 %v543
        %v629 = vpop.f32.mrb[0].mxu0
        %v630 = vadd.f32 0.0, %v629
        %v631 = vpop.f32.mrb[0].mxu0
        %v632 = vpop.f32.mrb[0].mxu0
        %v633 = vpop.f32.mrb[0].mxu0
        %634 = vdwg.mxu0
        %v635 = vadd.f32 %v510, %v589
        %v636 = vadd.f32 %v511, %v591
        %v637 = vadd.f32 %v512, %v630
        %v638 = vld [vmem:[%s168] sm:$0x3f]
        %s639 = scalar_lea.vmem %s1, 16
        %v640 = vld [vmem:[%s639] sm:$0xf]
        %v642 = vcombine.high %v638, %v638
        %v644 = vunpack.c.l.s4 1983009808
        %v645 = vunpack.c.0.s8 %v644
        %v646 = vlaneseq
        %v647 = vshrl.u32 %v646, 7
        %v648 = vsub.s32 %v645, %v647
        %v649 = vrot.slane %v638, %v648
        %v651 = vunpack.c.l.s4 1983009808
        %v652 = vunpack.c.0.s8 %v651
        %v653 = vlaneseq
        %v654 = vshrl.u32 %v653, 7
        %v655 = vsub.s32 %v652, %v654
        %v656 = vrot.slane %v642, %v655
        %v657 = vcombine.high %v649, %v649
        %658 = vrot.lane.b32.xlu0 %v649, 109
        %v659 = vpop.permute.xlu0 %658
        %660 = vrot.lane.b32.xlu0 %v657, 109
        %v661 = vpop.permute.xlu0 %660
        %662 = vrot.lane.b32.xlu0 %v656, 109
        %v663 = vpop.permute.xlu0 %662
        %vm664 = vcmask 891904
        %v665 = vsel %vm664, %v659, %v661
        %v666 = vsel %vm664, %v661, %v663
        %v668 = vsel %vm200, %v640, 0
        %v671 = vsel %vm204, %v665, 0
        %v674 = vsel %vm204, %v666, 0
        %v677 = vsel %vm204, %v663, 0
        %679 = vmatprep.subr.bf16.mxu0 %v674
        %680 = vmatpush1.bf16.msra.mxu0 %v671
        %681 = vmatprep.subr.bf16.mxu0 0
        %682 = vmatpush1.bf16.msra.mxu0 0
        %683 = vmatprep.subr.bf16.mxu0 0
        %684 = vmatpush1.bf16.msra.mxu0 0
        %685 = vmatprep.subr.bf16.mxu0 0
        %686 = vmatpush1.bf16.msra.mxu0 0
        %687 = vmatprep.subr.bf16.mxu0 0
        %688 = vmatpush1.bf16.msra.mxu0 0
        %689 = vmatprep.subr.bf16.mxu0 0
        %690 = vmatpush1.bf16.msra.mxu0 0
        %691 = vmatprep.subr.bf16.mxu0 0
        %692 = vmatpush1.bf16.msra.mxu0 0
        %693 = vmatprep.subr.bf16.mxu0 0
        %694 = vmatpush1.bf16.msra.mxu0 0
        %695 = vmatprep.subr.bf16.mxu0 0
        %696 = vmatpush1.bf16.msra.mxu0 0
        %697 = vmatprep.subr.bf16.mxu0 0
        %698 = vmatpush1.bf16.msra.mxu0 0
        %699 = vmatprep.subr.bf16.mxu0 0
        %700 = vmatpush1.bf16.msra.mxu0 0
        %701 = vmatprep.subr.bf16.mxu0 0
        %702 = vmatpush1.bf16.msra.mxu0 0
        %703 = vmatprep.subr.bf16.mxu0 0
        %704 = vmatpush1.bf16.msra.mxu0 0
        %705 = vmatprep.subr.bf16.mxu0 0
        %706 = vmatpush1.bf16.msra.mxu0 0
        %707 = vmatprep.subr.bf16.mxu0 0
        %708 = vmatpush1.bf16.msra.mxu0 0
        %709 = vmatprep.subr.bf16.mxu0 0
        %710 = vmatpush1.bf16.msra.mxu0 0
        %711 = vmatprep.mubr.bf16.mxu0 0
        %712 = vmatmul.mubr.bf16.gmra.mrb[0].mxu0 %v668
        %v713 = vpop.f32.mrb[0].mxu0
        %v714 = vadd.f32 0.0, %v713
        %v715 = vpop.f32.mrb[0].mxu0
        %v716 = vadd.f32 0.0, %v715
        %v717 = vpop.f32.mrb[0].mxu0
        %v718 = vpop.f32.mrb[0].mxu0
        %719 = vdwg.mxu0
        %720 = vmatprep.subr.bf16.mxu0 0
        %721 = vmatpush1.bf16.msra.mxu0 %v677
        %722 = vmatprep.subr.bf16.mxu0 0
        %723 = vmatpush1.bf16.msra.mxu0 0
        %724 = vmatprep.subr.bf16.mxu0 0
        %725 = vmatpush1.bf16.msra.mxu0 0
        %726 = vmatprep.subr.bf16.mxu0 0
        %727 = vmatpush1.bf16.msra.mxu0 0
        %728 = vmatprep.subr.bf16.mxu0 0
        %729 = vmatpush1.bf16.msra.mxu0 0
        %730 = vmatprep.subr.bf16.mxu0 0
        %731 = vmatpush1.bf16.msra.mxu0 0
        %732 = vmatprep.subr.bf16.mxu0 0
        %733 = vmatpush1.bf16.msra.mxu0 0
        %734 = vmatprep.subr.bf16.mxu0 0
        %735 = vmatpush1.bf16.msra.mxu0 0
        %736 = vmatprep.subr.bf16.mxu0 0
        %737 = vmatpush1.bf16.msra.mxu0 0
        %738 = vmatprep.subr.bf16.mxu0 0
        %739 = vmatpush1.bf16.msra.mxu0 0
        %740 = vmatprep.subr.bf16.mxu0 0
        %741 = vmatpush1.bf16.msra.mxu0 0
        %742 = vmatprep.subr.bf16.mxu0 0
        %743 = vmatpush1.bf16.msra.mxu0 0
        %744 = vmatprep.subr.bf16.mxu0 0
        %745 = vmatpush1.bf16.msra.mxu0 0
        %746 = vmatprep.subr.bf16.mxu0 0
        %747 = vmatpush1.bf16.msra.mxu0 0
        %748 = vmatprep.subr.bf16.mxu0 0
        %749 = vmatpush1.bf16.msra.mxu0 0
        %750 = vmatprep.subr.bf16.mxu0 0
        %751 = vmatpush1.bf16.msra.mxu0 0
        %752 = vmatprep.mubr.bf16.mxu0 0
        %753 = vmatmul.mubr.bf16.gmra.mrb[0].mxu0 %v668
        %v754 = vpop.f32.mrb[0].mxu0
        %v755 = vadd.f32 0.0, %v754
        %v756 = vpop.f32.mrb[0].mxu0
        %v757 = vpop.f32.mrb[0].mxu0
        %v758 = vpop.f32.mrb[0].mxu0
        %759 = vdwg.mxu0
        %v760 = vadd.f32 %v635, %v714
        %v761 = vadd.f32 %v636, %v716
        %v762 = vadd.f32 %v637, %v755
        %v763 = vld [vmem:[%s168] sm:$0x3f]
        %s764 = scalar_lea.vmem %s1, 20
        %v765 = vld [vmem:[%s764] sm:$0xf]
        %v767 = vcombine.high %v763, %v763
        %v769 = vunpack.c.l.s4 1983009808
        %v770 = vunpack.c.0.s8 %v769
        %v771 = vlaneseq
        %v772 = vshrl.u32 %v771, 7
        %v773 = vsub.s32 %v770, %v772
        %v774 = vrot.slane %v763, %v773
        %v776 = vunpack.c.l.s4 1983009808
        %v777 = vunpack.c.0.s8 %v776
        %v778 = vlaneseq
        %v779 = vshrl.u32 %v778, 7
        %v780 = vsub.s32 %v777, %v779
        %v781 = vrot.slane %v767, %v780
        %v782 = vcombine.high %v774, %v774
        %783 = vrot.lane.b32.xlu0 %v774, 108
        %v784 = vpop.permute.xlu0 %783
        %785 = vrot.lane.b32.xlu0 %v782, 108
        %v786 = vpop.permute.xlu0 %785
        %787 = vrot.lane.b32.xlu0 %v781, 108
        %v788 = vpop.permute.xlu0 %787
        %vm789 = vcmask 883712
        %v790 = vsel %vm789, %v784, %v786
        %v791 = vsel %vm789, %v786, %v788
        %v793 = vsel %vm200, %v765, 0
        %v796 = vsel %vm204, %v790, 0
        %v799 = vsel %vm204, %v791, 0
        %v802 = vsel %vm204, %v788, 0
        %804 = vmatprep.subr.bf16.mxu0 %v799
        %805 = vmatpush1.bf16.msra.mxu0 %v796
        %806 = vmatprep.subr.bf16.mxu0 0
        %807 = vmatpush1.bf16.msra.mxu0 0
        %808 = vmatprep.subr.bf16.mxu0 0
        %809 = vmatpush1.bf16.msra.mxu0 0
        %810 = vmatprep.subr.bf16.mxu0 0
        %811 = vmatpush1.bf16.msra.mxu0 0
        %812 = vmatprep.subr.bf16.mxu0 0
        %813 = vmatpush1.bf16.msra.mxu0 0
        %814 = vmatprep.subr.bf16.mxu0 0
        %815 = vmatpush1.bf16.msra.mxu0 0
        %816 = vmatprep.subr.bf16.mxu0 0
        %817 = vmatpush1.bf16.msra.mxu0 0
        %818 = vmatprep.subr.bf16.mxu0 0
        %819 = vmatpush1.bf16.msra.mxu0 0
        %820 = vmatprep.subr.bf16.mxu0 0
        %821 = vmatpush1.bf16.msra.mxu0 0
        %822 = vmatprep.subr.bf16.mxu0 0
        %823 = vmatpush1.bf16.msra.mxu0 0
        %824 = vmatprep.subr.bf16.mxu0 0
        %825 = vmatpush1.bf16.msra.mxu0 0
        %826 = vmatprep.subr.bf16.mxu0 0
        %827 = vmatpush1.bf16.msra.mxu0 0
        %828 = vmatprep.subr.bf16.mxu0 0
        %829 = vmatpush1.bf16.msra.mxu0 0
        %830 = vmatprep.subr.bf16.mxu0 0
        %831 = vmatpush1.bf16.msra.mxu0 0
        %832 = vmatprep.subr.bf16.mxu0 0
        %833 = vmatpush1.bf16.msra.mxu0 0
        %834 = vmatprep.subr.bf16.mxu0 0
        %835 = vmatpush1.bf16.msra.mxu0 0
        %836 = vmatprep.mubr.bf16.mxu0 0
        %837 = vmatmul.mubr.bf16.gmra.mrb[0].mxu0 %v793
        %v838 = vpop.f32.mrb[0].mxu0
        %v839 = vadd.f32 0.0, %v838
        %v840 = vpop.f32.mrb[0].mxu0
        %v841 = vadd.f32 0.0, %v840
        %v842 = vpop.f32.mrb[0].mxu0
        %v843 = vpop.f32.mrb[0].mxu0
        %844 = vdwg.mxu0
        %845 = vmatprep.subr.bf16.mxu0 0
        %846 = vmatpush1.bf16.msra.mxu0 %v802
        %847 = vmatprep.subr.bf16.mxu0 0
        %848 = vmatpush1.bf16.msra.mxu0 0
        %849 = vmatprep.subr.bf16.mxu0 0
        %850 = vmatpush1.bf16.msra.mxu0 0
        %851 = vmatprep.subr.bf16.mxu0 0
        %852 = vmatpush1.bf16.msra.mxu0 0
        %853 = vmatprep.subr.bf16.mxu0 0
        %854 = vmatpush1.bf16.msra.mxu0 0
        %855 = vmatprep.subr.bf16.mxu0 0
        %856 = vmatpush1.bf16.msra.mxu0 0
        %857 = vmatprep.subr.bf16.mxu0 0
        %858 = vmatpush1.bf16.msra.mxu0 0
        %859 = vmatprep.subr.bf16.mxu0 0
        %860 = vmatpush1.bf16.msra.mxu0 0
        %861 = vmatprep.subr.bf16.mxu0 0
        %862 = vmatpush1.bf16.msra.mxu0 0
        %863 = vmatprep.subr.bf16.mxu0 0
        %864 = vmatpush1.bf16.msra.mxu0 0
        %865 = vmatprep.subr.bf16.mxu0 0
        %866 = vmatpush1.bf16.msra.mxu0 0
        %867 = vmatprep.subr.bf16.mxu0 0
        %868 = vmatpush1.bf16.msra.mxu0 0
        %869 = vmatprep.subr.bf16.mxu0 0
        %870 = vmatpush1.bf16.msra.mxu0 0
        %871 = vmatprep.subr.bf16.mxu0 0
        %872 = vmatpush1.bf16.msra.mxu0 0
        %873 = vmatprep.subr.bf16.mxu0 0
        %874 = vmatpush1.bf16.msra.mxu0 0
        %875 = vmatprep.subr.bf16.mxu0 0
        %876 = vmatpush1.bf16.msra.mxu0 0
        %877 = vmatprep.mubr.bf16.mxu0 0
        %878 = vmatmul.mubr.bf16.gmra.mrb[0].mxu0 %v793
        %v879 = vpop.f32.mrb[0].mxu0
        %v880 = vadd.f32 0.0, %v879
        %v881 = vpop.f32.mrb[0].mxu0
        %v882 = vpop.f32.mrb[0].mxu0
        %v883 = vpop.f32.mrb[0].mxu0
        %884 = vdwg.mxu0
        %v885 = vadd.f32 %v760, %v839
        %v886 = vadd.f32 %v761, %v841
        %v887 = vadd.f32 %v762, %v880
        %v888 = vld [vmem:[%s168] sm:$0x3f]
        %s889 = scalar_lea.vmem %s1, 24
        %v890 = vld [vmem:[%s889] sm:$0xf]
        %v892 = vcombine.high %v888, %v888
        %v894 = vunpack.c.l.s4 1983009808
        %v895 = vunpack.c.0.s8 %v894
        %v896 = vlaneseq
        %v897 = vshrl.u32 %v896, 7
        %v898 = vsub.s32 %v895, %v897
        %v899 = vrot.slane %v888, %v898
        %v901 = vunpack.c.l.s4 1983009808
        %v902 = vunpack.c.0.s8 %v901
        %v903 = vlaneseq
        %v904 = vshrl.u32 %v903, 7
        %v905 = vsub.s32 %v902, %v904
        %v906 = vrot.slane %v892, %v905
        %v907 = vcombine.high %v899, %v899
        %908 = vrot.lane.b32.xlu0 %v899, 92
        %v909 = vpop.permute.xlu0 %908
        %910 = vrot.lane.b32.xlu0 %v907, 92
        %v911 = vpop.permute.xlu0 %910
        %912 = vrot.lane.b32.xlu0 %v906, 92
        %v913 = vpop.permute.xlu0 %912
        %vm914 = vcmask 752640
        %v915 = vsel %vm914, %v909, %v911
        %v916 = vsel %vm914, %v911, %v913
        %v918 = vsel %vm200, %v890, 0
        %v921 = vsel %vm204, %v915, 0
        %v924 = vsel %vm204, %v916, 0
        %v927 = vsel %vm204, %v913, 0
        %929 = vmatprep.subr.bf16.mxu0 %v924
        %930 = vmatpush1.bf16.msra.mxu0 %v921
        %931 = vmatprep.subr.bf16.mxu0 0
        %932 = vmatpush1.bf16.msra.mxu0 0
        %933 = vmatprep.subr.bf16.mxu0 0
        %934 = vmatpush1.bf16.msra.mxu0 0
        %935 = vmatprep.subr.bf16.mxu0 0
        %936 = vmatpush1.bf16.msra.mxu0 0
        %937 = vmatprep.subr.bf16.mxu0 0
        %938 = vmatpush1.bf16.msra.mxu0 0
        %939 = vmatprep.subr.bf16.mxu0 0
        %940 = vmatpush1.bf16.msra.mxu0 0
        %941 = vmatprep.subr.bf16.mxu0 0
        %942 = vmatpush1.bf16.msra.mxu0 0
        %943 = vmatprep.subr.bf16.mxu0 0
        %944 = vmatpush1.bf16.msra.mxu0 0
        %945 = vmatprep.subr.bf16.mxu0 0
        %946 = vmatpush1.bf16.msra.mxu0 0
        %947 = vmatprep.subr.bf16.mxu0 0
        %948 = vmatpush1.bf16.msra.mxu0 0
        %949 = vmatprep.subr.bf16.mxu0 0
        %950 = vmatpush1.bf16.msra.mxu0 0
        %951 = vmatprep.subr.bf16.mxu0 0
        %952 = vmatpush1.bf16.msra.mxu0 0
        %953 = vmatprep.subr.bf16.mxu0 0
        %954 = vmatpush1.bf16.msra.mxu0 0
        %955 = vmatprep.subr.bf16.mxu0 0
        %956 = vmatpush1.bf16.msra.mxu0 0
        %957 = vmatprep.subr.bf16.mxu0 0
        %958 = vmatpush1.bf16.msra.mxu0 0
        %959 = vmatprep.subr.bf16.mxu0 0
        %960 = vmatpush1.bf16.msra.mxu0 0
        %961 = vmatprep.mubr.bf16.mxu0 0
        %962 = vmatmul.mubr.bf16.gmra.mrb[0].mxu0 %v918
        %v963 = vpop.f32.mrb[0].mxu0
        %v964 = vadd.f32 0.0, %v963
        %v965 = vpop.f32.mrb[0].mxu0
        %v966 = vadd.f32 0.0, %v965
        %v967 = vpop.f32.mrb[0].mxu0
        %v968 = vpop.f32.mrb[0].mxu0
        %969 = vdwg.mxu0
        %970 = vmatprep.subr.bf16.mxu0 0
        %971 = vmatpush1.bf16.msra.mxu0 %v927
        %972 = vmatprep.subr.bf16.mxu0 0
        %973 = vmatpush1.bf16.msra.mxu0 0
        %974 = vmatprep.subr.bf16.mxu0 0
        %975 = vmatpush1.bf16.msra.mxu0 0
        %976 = vmatprep.subr.bf16.mxu0 0
        %977 = vmatpush1.bf16.msra.mxu0 0
        %978 = vmatprep.subr.bf16.mxu0 0
        %979 = vmatpush1.bf16.msra.mxu0 0
        %980 = vmatprep.subr.bf16.mxu0 0
        %981 = vmatpush1.bf16.msra.mxu0 0
        %982 = vmatprep.subr.bf16.mxu0 0
        %983 = vmatpush1.bf16.msra.mxu0 0
        %984 = vmatprep.subr.bf16.mxu0 0
        %985 = vmatpush1.bf16.msra.mxu0 0
        %986 = vmatprep.subr.bf16.mxu0 0
        %987 = vmatpush1.bf16.msra.mxu0 0
        %988 = vmatprep.subr.bf16.mxu0 0
        %989 = vmatpush1.bf16.msra.mxu0 0
        %990 = vmatprep.subr.bf16.mxu0 0
        %991 = vmatpush1.bf16.msra.mxu0 0
        %992 = vmatprep.subr.bf16.mxu0 0
        %993 = vmatpush1.bf16.msra.mxu0 0
        %994 = vmatprep.subr.bf16.mxu0 0
        %995 = vmatpush1.bf16.msra.mxu0 0
        %996 = vmatprep.subr.bf16.mxu0 0
        %997 = vmatpush1.bf16.msra.mxu0 0
        %998 = vmatprep.subr.bf16.mxu0 0
        %999 = vmatpush1.bf16.msra.mxu0 0
        %1000 = vmatprep.subr.bf16.mxu0 0
        %1001 = vmatpush1.bf16.msra.mxu0 0
        %1002 = vmatprep.mubr.bf16.mxu0 0
        %1003 = vmatmul.mubr.bf16.gmra.mrb[0].mxu0 %v918
        %v1004 = vpop.f32.mrb[0].mxu0
        %v1005 = vadd.f32 0.0, %v1004
        %v1006 = vpop.f32.mrb[0].mxu0
        %v1007 = vpop.f32.mrb[0].mxu0
        %v1008 = vpop.f32.mrb[0].mxu0
        %1009 = vdwg.mxu0
        %v1010 = vadd.f32 %v885, %v964
        %v1011 = vadd.f32 %v886, %v966
        %v1012 = vadd.f32 %v887, %v1005
        %v1013 = vld [vmem:[%s168] sm:$0x3f]
        %s1014 = scalar_lea.vmem %s1, 28
        %v1015 = vld [vmem:[%s1014] sm:$0xf]
        %v1017 = vcombine.high %v1013, %v1013
        %v1019 = vunpack.c.l.s4 1983009808
        %v1020 = vunpack.c.0.s8 %v1019
        %v1021 = vlaneseq
        %v1022 = vshrl.u32 %v1021, 7
        %v1023 = vsub.s32 %v1020, %v1022
        %v1024 = vrot.slane %v1013, %v1023
        %v1026 = vunpack.c.l.s4 1983009808
        %v1027 = vunpack.c.0.s8 %v1026
        %v1028 = vlaneseq
        %v1029 = vshrl.u32 %v1028, 7
        %v1030 = vsub.s32 %v1027, %v1029
        %v1031 = vrot.slane %v1017, %v1030
        %v1032 = vcombine.high %v1024, %v1024
        %1033 = vrot.lane.b32.xlu0 %v1024, 91
        %v1034 = vpop.permute.xlu0 %1033
        %1035 = vrot.lane.b32.xlu0 %v1032, 91
        %v1036 = vpop.permute.xlu0 %1035
        %1037 = vrot.lane.b32.xlu0 %v1031, 91
        %v1038 = vpop.permute.xlu0 %1037
        %vm1039 = vcmask 744448
        %v1040 = vsel %vm1039, %v1034, %v1036
        %v1041 = vsel %vm1039, %v1036, %v1038
        %v1043 = vsel %vm200, %v1015, 0
        %v1046 = vsel %vm204, %v1040, 0
        %v1049 = vsel %vm204, %v1041, 0
        %v1052 = vsel %vm204, %v1038, 0
        %1054 = vmatprep.subr.bf16.mxu0 %v1049
        %1055 = vmatpush1.bf16.msra.mxu0 %v1046
        %1056 = vmatprep.subr.bf16.mxu0 0
        %1057 = vmatpush1.bf16.msra.mxu0 0
        %1058 = vmatprep.subr.bf16.mxu0 0
        %1059 = vmatpush1.bf16.msra.mxu0 0
        %1060 = vmatprep.subr.bf16.mxu0 0
        %1061 = vmatpush1.bf16.msra.mxu0 0
        %1062 = vmatprep.subr.bf16.mxu0 0
        %1063 = vmatpush1.bf16.msra.mxu0 0
        %1064 = vmatprep.subr.bf16.mxu0 0
        %1065 = vmatpush1.bf16.msra.mxu0 0
        %1066 = vmatprep.subr.bf16.mxu0 0
        %1067 = vmatpush1.bf16.msra.mxu0 0
        %1068 = vmatprep.subr.bf16.mxu0 0
        %1069 = vmatpush1.bf16.msra.mxu0 0
        %1070 = vmatprep.subr.bf16.mxu0 0
        %1071 = vmatpush1.bf16.msra.mxu0 0
        %1072 = vmatprep.subr.bf16.mxu0 0
        %1073 = vmatpush1.bf16.msra.mxu0 0
        %1074 = vmatprep.subr.bf16.mxu0 0
        %1075 = vmatpush1.bf16.msra.mxu0 0
        %1076 = vmatprep.subr.bf16.mxu0 0
        %1077 = vmatpush1.bf16.msra.mxu0 0
        %1078 = vmatprep.subr.bf16.mxu0 0
        %1079 = vmatpush1.bf16.msra.mxu0 0
        %1080 = vmatprep.subr.bf16.mxu0 0
        %1081 = vmatpush1.bf16.msra.mxu0 0
        %1082 = vmatprep.subr.bf16.mxu0 0
        %1083 = vmatpush1.bf16.msra.mxu0 0
        %1084 = vmatprep.subr.bf16.mxu0 0
        %1085 = vmatpush1.bf16.msra.mxu0 0
        %1086 = vmatprep.mubr.bf16.mxu0 0
        %1087 = vmatmul.mubr.bf16.gmra.mrb[0].mxu0 %v1043
        %v1088 = vpop.f32.mrb[0].mxu0
        %v1089 = vadd.f32 0.0, %v1088
        %v1090 = vpop.f32.mrb[0].mxu0
        %v1091 = vadd.f32 0.0, %v1090
        %v1092 = vpop.f32.mrb[0].mxu0
        %v1093 = vpop.f32.mrb[0].mxu0
        %1094 = vdwg.mxu0
        %1095 = vmatprep.subr.bf16.mxu0 0
        %1096 = vmatpush1.bf16.msra.mxu0 %v1052
        %1097 = vmatprep.subr.bf16.mxu0 0
        %1098 = vmatpush1.bf16.msra.mxu0 0
        %1099 = vmatprep.subr.bf16.mxu0 0
        %1100 = vmatpush1.bf16.msra.mxu0 0
        %1101 = vmatprep.subr.bf16.mxu0 0
        %1102 = vmatpush1.bf16.msra.mxu0 0
        %1103 = vmatprep.subr.bf16.mxu0 0
        %1104 = vmatpush1.bf16.msra.mxu0 0
        %1105 = vmatprep.subr.bf16.mxu0 0
        %1106 = vmatpush1.bf16.msra.mxu0 0
        %1107 = vmatprep.subr.bf16.mxu0 0
        %1108 = vmatpush1.bf16.msra.mxu0 0
        %1109 = vmatprep.subr.bf16.mxu0 0
        %1110 = vmatpush1.bf16.msra.mxu0 0
        %1111 = vmatprep.subr.bf16.mxu0 0
        %1112 = vmatpush1.bf16.msra.mxu0 0
        %1113 = vmatprep.subr.bf16.mxu0 0
        %1114 = vmatpush1.bf16.msra.mxu0 0
        %1115 = vmatprep.subr.bf16.mxu0 0
        %1116 = vmatpush1.bf16.msra.mxu0 0
        %1117 = vmatprep.subr.bf16.mxu0 0
        %1118 = vmatpush1.bf16.msra.mxu0 0
        %1119 = vmatprep.subr.bf16.mxu0 0
        %1120 = vmatpush1.bf16.msra.mxu0 0
        %1121 = vmatprep.subr.bf16.mxu0 0
        %1122 = vmatpush1.bf16.msra.mxu0 0
        %1123 = vmatprep.subr.bf16.mxu0 0
        %1124 = vmatpush1.bf16.msra.mxu0 0
        %1125 = vmatprep.subr.bf16.mxu0 0
        %1126 = vmatpush1.bf16.msra.mxu0 0
        %1127 = vmatprep.mubr.bf16.mxu0 0
        %1128 = vmatmul.mubr.bf16.gmra.mrb[0].mxu0 %v1043
        %v1129 = vpop.f32.mrb[0].mxu0
        %v1130 = vadd.f32 0.0, %v1129
        %v1131 = vpop.f32.mrb[0].mxu0
        %v1132 = vpop.f32.mrb[0].mxu0
        %v1133 = vpop.f32.mrb[0].mxu0
        %1134 = vdwg.mxu0
        %v1135 = vadd.f32 %v1010, %v1089
        %v1136 = vadd.f32 %v1011, %v1091
        %v1137 = vadd.f32 %v1012, %v1130
        %v1138 = vld [vmem:[%s168] sm:$0x3f]
        %s1139 = scalar_lea.vmem %s1, 32
        %v1140 = vld [vmem:[%s1139] sm:$0xf]
        %v1142 = vcombine.high %v1138, %v1138
        %v1144 = vunpack.c.l.s4 1983009808
        %v1145 = vunpack.c.0.s8 %v1144
        %v1146 = vlaneseq
        %v1147 = vshrl.u32 %v1146, 7
        %v1148 = vsub.s32 %v1145, %v1147
        %v1149 = vrot.slane %v1138, %v1148
        %v1151 = vunpack.c.l.s4 1983009808
        %v1152 = vunpack.c.0.s8 %v1151
        %v1153 = vlaneseq
        %v1154 = vshrl.u32 %v1153, 7
        %v1155 = vsub.s32 %v1152, %v1154
        %v1156 = vrot.slane %v1142, %v1155
        %v1157 = vcombine.high %v1149, %v1149
        %1158 = vrot.lane.b32.xlu0 %v1149, 90
        %v1159 = vpop.permute.xlu0 %1158
        %1160 = vrot.lane.b32.xlu0 %v1157, 90
        %v1161 = vpop.permute.xlu0 %1160
        %1162 = vrot.lane.b32.xlu0 %v1156, 90
        %v1163 = vpop.permute.xlu0 %1162
        %vm1164 = vcmask 736256
        %v1165 = vsel %vm1164, %v1159, %v1161
        %v1166 = vsel %vm1164, %v1161, %v1163
        %v1168 = vsel %vm200, %v1140, 0
        %v1171 = vsel %vm204, %v1165, 0
        %v1174 = vsel %vm204, %v1166, 0
        %v1177 = vsel %vm204, %v1163, 0
        %1179 = vmatprep.subr.bf16.mxu0 %v1174
        %1180 = vmatpush1.bf16.msra.mxu0 %v1171
        %1181 = vmatprep.subr.bf16.mxu0 0
        %1182 = vmatpush1.bf16.msra.mxu0 0
        %1183 = vmatprep.subr.bf16.mxu0 0
        %1184 = vmatpush1.bf16.msra.mxu0 0
        %1185 = vmatprep.subr.bf16.mxu0 0
        %1186 = vmatpush1.bf16.msra.mxu0 0
        %1187 = vmatprep.subr.bf16.mxu0 0
        %1188 = vmatpush1.bf16.msra.mxu0 0
        %1189 = vmatprep.subr.bf16.mxu0 0
        %1190 = vmatpush1.bf16.msra.mxu0 0
        %1191 = vmatprep.subr.bf16.mxu0 0
        %1192 = vmatpush1.bf16.msra.mxu0 0
        %1193 = vmatprep.subr.bf16.mxu0 0
        %1194 = vmatpush1.bf16.msra.mxu0 0
        %1195 = vmatprep.subr.bf16.mxu0 0
        %1196 = vmatpush1.bf16.msra.mxu0 0
        %1197 = vmatprep.subr.bf16.mxu0 0
        %1198 = vmatpush1.bf16.msra.mxu0 0
        %1199 = vmatprep.subr.bf16.mxu0 0
        %1200 = vmatpush1.bf16.msra.mxu0 0
        %1201 = vmatprep.subr.bf16.mxu0 0
        %1202 = vmatpush1.bf16.msra.mxu0 0
        %1203 = vmatprep.subr.bf16.mxu0 0
        %1204 = vmatpush1.bf16.msra.mxu0 0
        %1205 = vmatprep.subr.bf16.mxu0 0
        %1206 = vmatpush1.bf16.msra.mxu0 0
        %1207 = vmatprep.subr.bf16.mxu0 0
        %1208 = vmatpush1.bf16.msra.mxu0 0
        %1209 = vmatprep.subr.bf16.mxu0 0
        %1210 = vmatpush1.bf16.msra.mxu0 0
        %1211 = vmatprep.mubr.bf16.mxu0 0
        %1212 = vmatmul.mubr.bf16.gmra.mrb[0].mxu0 %v1168
        %v1213 = vpop.f32.mrb[0].mxu0
        %v1214 = vadd.f32 0.0, %v1213
        %v1215 = vpop.f32.mrb[0].mxu0
        %v1216 = vadd.f32 0.0, %v1215
        %v1217 = vpop.f32.mrb[0].mxu0
        %v1218 = vpop.f32.mrb[0].mxu0
        %1219 = vdwg.mxu0
        %1220 = vmatprep.subr.bf16.mxu0 0
        %1221 = vmatpush1.bf16.msra.mxu0 %v1177
        %1222 = vmatprep.subr.bf16.mxu0 0
        %1223 = vmatpush1.bf16.msra.mxu0 0
        %1224 = vmatprep.subr.bf16.mxu0 0
        %1225 = vmatpush1.bf16.msra.mxu0 0
        %1226 = vmatprep.subr.bf16.mxu0 0
        %1227 = vmatpush1.bf16.msra.mxu0 0
        %1228 = vmatprep.subr.bf16.mxu0 0
        %1229 = vmatpush1.bf16.msra.mxu0 0
        %1230 = vmatprep.subr.bf16.mxu0 0
        %1231 = vmatpush1.bf16.msra.mxu0 0
        %1232 = vmatprep.subr.bf16.mxu0 0
        %1233 = vmatpush1.bf16.msra.mxu0 0
        %1234 = vmatprep.subr.bf16.mxu0 0
        %1235 = vmatpush1.bf16.msra.mxu0 0
        %1236 = vmatprep.subr.bf16.mxu0 0
        %1237 = vmatpush1.bf16.msra.mxu0 0
        %1238 = vmatprep.subr.bf16.mxu0 0
        %1239 = vmatpush1.bf16.msra.mxu0 0
        %1240 = vmatprep.subr.bf16.mxu0 0
        %1241 = vmatpush1.bf16.msra.mxu0 0
        %1242 = vmatprep.subr.bf16.mxu0 0
        %1243 = vmatpush1.bf16.msra.mxu0 0
        %1244 = vmatprep.subr.bf16.mxu0 0
        %1245 = vmatpush1.bf16.msra.mxu0 0
        %1246 = vmatprep.subr.bf16.mxu0 0
        %1247 = vmatpush1.bf16.msra.mxu0 0
        %1248 = vmatprep.subr.bf16.mxu0 0
        %1249 = vmatpush1.bf16.msra.mxu0 0
        %1250 = vmatprep.subr.bf16.mxu0 0
        %1251 = vmatpush1.bf16.msra.mxu0 0
        %1252 = vmatprep.mubr.bf16.mxu0 0
        %1253 = vmatmul.mubr.bf16.gmra.mrb[0].mxu0 %v1168
        %v1254 = vpop.f32.mrb[0].mxu0
        %v1255 = vadd.f32 0.0, %v1254
        %v1256 = vpop.f32.mrb[0].mxu0
        %v1257 = vpop.f32.mrb[0].mxu0
        %v1258 = vpop.f32.mrb[0].mxu0
        %1259 = vdwg.mxu0
        %v1260 = vadd.f32 %v1135, %v1214
        %v1261 = vadd.f32 %v1136, %v1216
        %v1262 = vadd.f32 %v1137, %v1255
        %v1263 = vld [vmem:[%s2] sm:$0x7]
        %v1265 = vlaneseq
        %v1266 = vshrl.u32 %v1265, 7
        %v1267 = vsub.s32 0, %v1266
        %v1268 = vrot.slane %v1263, %v1267
        %v1269 = vlaneseq
        %v1270 = vshrl.u32 %v1269, 7
        %v1271 = vsub.s32 1, %v1270
        %v1272 = vrot.slane %v1263, %v1271
        %v1273 = vlaneseq
        %v1274 = vshrl.u32 %v1273, 7
        %v1275 = vsub.s32 2, %v1274
        %v1276 = vrot.slane %v1263, %v1275
        %v1280 = vmul.f32 %v1260, %v1268
        %v1281 = vmul.f32 %v1261, %v1272
        %v1282 = vmul.f32 %v1262, %v1276
        %v1283 = vadd.f32 %v1280, %v1281
        %vm1284 = vcmask 261120
        %v1285 = vsel %vm1284, %v1282, 0.0
        %v1286 = vadd.f32 %v1283, %v1285
        %1287 = vadd.xlane.f32.xlu0 %v1286
        %v1288 = vpop.xlane.xlu0 %1287
        %v1289 = vmul.f32 %v1288, 0.00390625
        %v1290 = vsub.f32 %v1260, %v1289
        %v1291 = vsub.f32 %v1261, %v1289
        %v1292 = vsub.f32 %v1262, %v1289
        %v1293 = vmul.f32 %v1290, %v1290
        %v1294 = vmul.f32 %v1291, %v1291
        %v1295 = vmul.f32 %v1292, %v1292
        %v1296 = vmul.f32 %v1293, %v1268
        %v1297 = vmul.f32 %v1294, %v1272
        %v1298 = vmul.f32 %v1295, %v1276
        %v1299 = vadd.f32 %v1296, %v1297
        %v1300 = vsel %vm1284, %v1298, 0.0
        %v1301 = vadd.f32 %v1299, %v1300
        %1302 = vadd.xlane.f32.xlu0 %v1301
        %v1303 = vpop.xlane.xlu0 %1302
        %v1304 = vmul.f32 %v1303, 0.00390625
        %v1305 = vadd.f32 %v1304, 1e-05
        %v1306 = vrsqrt.pop %v1305
        %v1307 = vmul.f32 %v1290, %v1306
        %v1308 = vmul.f32 %v1291, %v1306
        %v1309 = vmul.f32 %v1292, %v1306
        %v1310 = vmax.f32 %v1307, 0.0
        %v1311 = vmax.f32 %v1308, 0.0
        %v1312 = vmax.f32 %v1309, 0.0
        %1313 = vst [vmem:[%s163] sm:$0xff] %v1310
        %1314 = vst [vmem:[%s163 + $0x8] sm:$0xff] %v1311
        %1315 = vst.msk [vmem:[%s163 + $0x10] sm:$0xff] %vm1284, %v1312
        %s1316 = sand.u32 %s93, 1
        %s1317 = scalar_lea.sflag [#allocation3], %s1316
        %s1318 = sand.u32 %s93, 1
        %s1319 = smul.addr %s1318, 24
        %s1320 = scalar_lea.vmem [#allocation2], %s1319
        // Predicated region
        $region33: #{tpu_custom_call.1} parent=31 // pred_check
          %p1321 = pneg %p103
        $region34: #{tpu_custom_call.1} parent=31 // pred_check_branch
          %1323 = sbr.rel (%p1321) target = $region36
        $region35: #{tpu_custom_call.1} parent=31 // pred_region
          %s1325 = ssub.s32 384, 384
          %1326 = vsyncadd %s1317, %s1325
          %s1327 = smul.addr %s17, 3
          %s1328 = smul.addr %s1327, 128
          %s1329 = scalar_lea.hbm %s3, %s1328
          %s1331 = sshll.u32 %s1320, 4
          %s1332 = int_to_ptr.vmem [resolvable:$true] %s1331
          %1334 = dma.vmem_to_hbm [thread:$0]  %s1332, 384, %s1329, %s1317
        $region36: #{tpu_custom_call.1} parent=31 // pred_fallthru
          _
      $region32: #{tpu_custom_call.1} parent=5 // pred_fallthru
        _
      %p1335 = scmp.le.s32.totalorder 2, %s12
      // Predicated region
      $region37: #{tpu_custom_call.1} parent=5 // pred_check
        %p1336 = pneg %p1335
      $region38: #{tpu_custom_call.1} parent=5 // pred_check_branch
        %1338 = sbr.rel (%p1336) target = $region40
      $region39: #{tpu_custom_call.1} parent=5 // pred_region
        %s1339 = ssub.s32 %s12, 2
        // Predicated region
        $region41: #{tpu_custom_call.1} parent=39 // pred_check
          %p1340 = pneg %p109
        $region42: #{tpu_custom_call.1} parent=39 // pred_check_branch
          %1342 = sbr.rel (%p1340) target = $region44
        $region43: #{tpu_custom_call.1} parent=39 // pred_region
          %s1343 = sand.u32 %s94, 1
          %s1344 = scalar_lea.sflag [#allocation3], %s1343
          %s1345 = sand.u32 %s94, 1
          %s1346 = smul.addr %s1345, 24
          %s1347 = scalar_lea.vmem [#allocation2], %s1346
          %1348 = dma.done %s1344, 384
        $region44: #{tpu_custom_call.1} parent=39 // pred_fallthru
          _
      $region40: #{tpu_custom_call.1} parent=5 // pred_fallthru
        _
    $region6: #{tpu_custom_call.1} parent=1 // loop_footer
      %s16 = sadd.s32 1, %s12
    $region7: #{tpu_custom_call.1} parent=1 // loop_footer_branch
      %11 = sbr.rel target = $region3
    $region8: #{tpu_custom_call.1} parent=1 // loop_exit
      _
    %1349 = vsyncpa [#allocation3], 1
    %s1350 = scalar_lea.sflag [#allocation3], 1
    %1351 = vsyncpa %s1350, 1

</llo_original>
